<compile_context>
chip_gen: v7x
topology: tpu7x:2x2x1
jax: 0.10.0
libtpu: 0.0.40
codegen_flags: <defaults>
</compile_context>

<pallas_src>
import math
import functools

import jax
import jax.numpy as jnp
from jax.experimental import pallas as pl
from jax.experimental.pallas import tpu as pltpu

_SQRT_2_OVER_PI = math.sqrt(2.0 / math.pi)


def _gelu_new_kernel(x_ref, o_ref):
    x = x_ref[...].astype(jnp.float32)
    inner = _SQRT_2_OVER_PI * (x + 0.044715 * (x * x * x))
    o_ref[...] = (0.5 * x * (1.0 + jnp.tanh(inner))).astype(o_ref.dtype)


def _silu_kernel(x_ref, o_ref):
    x = x_ref[...].astype(jnp.float32)
    o_ref[...] = (x * jax.nn.sigmoid(x)).astype(o_ref.dtype)


def _choose_layout(total, dims):
    """Pick a lane-dense 2-D (rows, width) layout for an elementwise op."""
    if dims >= 128 and dims % 128 == 0:
        return total // dims, dims
    # Elementwise, so any reshape is valid -> prefer a lane-dense slab.
    for cand in (1024, 512, 256, 128):
        if total % cand == 0:
            return total // cand, cand
    # Fallback: keep original trailing dim (block last dim == full array dim).
    return total // dims, dims


def _choose_tile_rows(rows, width, itemsize, target_bytes=4 * 1024 * 1024):
    """~4 MiB tiles, multiple of 8 rows, with >= 2 grid steps when possible."""
    bytes_per_row = max(1, width * itemsize)
    tr = max(8, (target_bytes // bytes_per_row) // 8 * 8)
    tr = min(tr, rows)
    # Keep at least 2 grid steps when there's enough work so the "parallel"
    # grid axis can be sharded across both TensorCores on megacore parts (v7x).
    if tr >= rows and rows >= 16:
        half = -(-rows // 2)  # ceil(rows / 2)
        tr = min(rows, ((half + 7) // 8) * 8)
    return tr


@functools.partial(jax.jit, static_argnames=("activation", "donate_input"))
def activation_forward(x, activation="gelu", donate_input=False):
    """Elementwise activation, exact match of the PyTorch module semantics."""
    if activation == "gelu":
        kernel = _gelu_new_kernel
    elif activation == "sigmoid":  # module's 'sigmoid' option is x * sigmoid(x)
        kernel = _silu_kernel
    else:
        raise ValueError(f"unknown activation {activation}")

    orig_shape = x.shape
    total = x.size
    if total == 0:
        return x
    dims = orig_shape[-1] if x.ndim else 1

    rows, width = _choose_layout(total, dims)
    x2d = x.reshape(rows, width)

    itemsize = jnp.dtype(x.dtype).itemsize
    tr = _choose_tile_rows(rows, width, itemsize)
    grid_r = pl.cdiv(rows, tr)

    # 2 double-buffered inputs + 2 double-buffered outputs of tile_bytes each.
    tile_bytes = tr * width * itemsize
    vmem_limit = int(min(64 * 1024 * 1024, max(32 * 1024 * 1024, 6 * tile_bytes)))

    cost = pl.CostEstimate(
        flops=10 * total,
        transcendentals=total,
        bytes_accessed=2 * total * itemsize,
    )

    out2d = pl.pallas_call(
        kernel,
        out_shape=jax.ShapeDtypeStruct((rows, width), x.dtype),
        grid_spec=pltpu.PrefetchScalarGridSpec(
            num_scalar_prefetch=0,
            grid=(grid_r,),
            in_specs=[pl.BlockSpec((tr, width), lambda i: (i, 0))],
            out_specs=pl.BlockSpec((tr, width), lambda i: (i, 0)),
        ),
        compiler_params=pltpu.CompilerParams(
            dimension_semantics=("parallel",),
            vmem_limit_bytes=vmem_limit,
        ),
        cost_estimate=cost,
        # Only useful when the caller also donates x at the jit boundary;
        # otherwise XLA inserts a defensive copy, so default is off.
        input_output_aliases={0: 0} if donate_input else {},
    )(x2d)

    return out2d.reshape(orig_shape)


def _gelu_new_ref(x):
    x = x.astype(jnp.float32)
    return 0.5 * x * (1.0 + jnp.tanh(_SQRT_2_OVER_PI * (x + 0.044715 * x ** 3)))


if __name__ == "__main__":
    key = jax.random.PRNGKey(0)
    # Module-shaped input: (batch=2, seq=8, hidden=32).
    x = jax.random.normal(key, (2, 8, 32), dtype=jnp.float32)

    out = jax.block_until_ready(activation_forward(x, activation="gelu"))
    assert out.shape == x.shape and out.dtype == x.dtype
    assert jnp.allclose(out, _gelu_new_ref(x), atol=1e-5, rtol=1e-5)

    # 'sigmoid' branch of the module: x * sigmoid(x).
    out_silu = jax.block_until_ready(activation_forward(x, activation="sigmoid"))
    assert jnp.allclose(out_silu, x * jax.nn.sigmoid(x), atol=1e-5, rtol=1e-5)

    # Exercise the multi-step grid with a ragged last block (no host pad/slice).
    x2 = jax.random.normal(jax.random.PRNGKey(1), (4, 99, 256), dtype=jnp.float32)
    out2 = jax.block_until_ready(activation_forward(x2, activation="gelu"))
    assert jnp.allclose(out2, _gelu_new_ref(x2), atol=1e-5, rtol=1e-5)

    # Exercise the odd-dims fallback layout (dims=7, total not divisible by 128).
    x3 = jax.random.normal(jax.random.PRNGKey(2), (3, 5, 7), dtype=jnp.float32)
    out3 = jax.block_until_ready(activation_forward(x3, activation="gelu"))
    assert jnp.allclose(out3, _gelu_new_ref(x3), atol=1e-5, rtol=1e-5)

    print("KERNEL_OK")
</pallas_src>

<mosaic_0001>
module attributes {stable_mosaic.version = 11 : i64} {
  func.func @_gelu_new_kernel(%arg0: i32, %arg1: memref<1x512xf32, #tpu.memory_space<vmem>>, %arg2: memref<1x512xf32, #tpu.memory_space<vmem>>) attributes {dimension_semantics = [#tpu.dimension_semantics<parallel>], iteration_bounds = array<i64: 1>, scalar_prefetch = 0 : i64, scratch_operands = 0 : i64, tpu.core_type = #tpu.core_type<tc>, window_params = [{transform_indices = @transform_0, window_bounds = array<i64: 1, 512>}, {transform_indices = @transform_1, window_bounds = array<i64: 1, 512>}]} {
    %c0 = arith.constant 0 : index
    %c0_0 = arith.constant 0 : index
    %0 = vector.load %arg1[%c0, %c0_0] : memref<1x512xf32, #tpu.memory_space<vmem>>, vector<1x512xf32>
    %1 = arith.mulf %0, %0 : vector<1x512xf32>
    %2 = arith.mulf %1, %0 : vector<1x512xf32>
    %cst = arith.constant 4.471500e-02 : f32
    %3 = vector.broadcast %cst : f32 to vector<1x512xf32>
    %4 = arith.mulf %3, %2 : vector<1x512xf32>
    %5 = arith.addf %0, %4 : vector<1x512xf32>
    %cst_1 = arith.constant 0.797884583 : f32
    %6 = vector.broadcast %cst_1 : f32 to vector<1x512xf32>
    %7 = arith.mulf %6, %5 : vector<1x512xf32>
    %cst_2 = arith.constant 5.000000e-01 : f32
    %8 = vector.broadcast %cst_2 : f32 to vector<1x512xf32>
    %9 = arith.mulf %8, %0 : vector<1x512xf32>
    %10 = math.tanh %7 : vector<1x512xf32>
    %cst_3 = arith.constant 1.000000e+00 : f32
    %11 = vector.broadcast %cst_3 : f32 to vector<1x512xf32>
    %12 = arith.addf %11, %10 : vector<1x512xf32>
    %13 = arith.mulf %9, %12 : vector<1x512xf32>
    %c0_4 = arith.constant 0 : index
    %c0_5 = arith.constant 0 : index
    %14 = vector.load %arg2[%c0_4, %c0_5] : memref<1x512xf32, #tpu.memory_space<vmem>>, vector<1x512xf32>
    tpu.vector_store %arg2[%c0_4, %c0_5], %13 {strides = array<i32>} : memref<1x512xf32, #tpu.memory_space<vmem>>, vector<1x512xf32>,
    return
  }
  func.func @transform_0(%arg0: i32) -> (i32, i32) {
    %c0_i32 = arith.constant 0 : i32
    %c0_i32_0 = arith.constant 0 : i32
    return %arg0, %c0_i32 : i32, i32
  }
  func.func @transform_1(%arg0: i32) -> (i32, i32) {
    %c0_i32 = arith.constant 0 : i32
    %c0_i32_0 = arith.constant 0 : i32
    return %arg0, %c0_i32 : i32, i32
  }
}

</mosaic_0001>

<llo_original>
// kernel: activation_forward.1
$region0: #{activation_forward.1}
  #allocation0 [shape = 'u32[]', space=smem, size = 0x4, offset = 0x4, fixed_abs, tag = 'smem constant byte address 0x4 - core index']
  #allocation1 [shape = 'u32[144,128]{1,0:T(1,128)}', space=vmem, size = 0x12000, scoped, tag = 'internal scratch']
  %s0 = inlined_call_operand.vmem [shape: f32[1,512], index: 0, kind: input, shape index: {}]
  %s1 = inlined_call_operand.vmem [shape: f32[1,512], index: 1, kind: output, shape index: {}]
  %s2 = sld [smem:[#allocation0]]
  $region14: #{activation_forward.1} parent=0
    _
  %s4 = ssub.s32 1, %s2
  %s5 = scalar_select 0, %s4, %s2
  // Predicated region
  $region2: #{activation_forward.1} parent=0 // pred_check
    _
  $region3: #{activation_forward.1} parent=0 // pred_check_branch
    %7 = sbr.rel (0) target = $region5
  $region4: #{activation_forward.1} parent=0 // pred_region
    _
  $region5: #{activation_forward.1} parent=0 // pred_fallthru
    _
  %v8 = vld [vmem:[%s0] sm:$0xf]
  %v9 = vmul.f32 %v8, %v8
  %v10 = vmul.f32 %v9, %v8
  %v11 = vmul.f32 %v10, 0.044715
  %v12 = vadd.f32 %v8, %v11
  %v13 = vmul.f32 %v12, 0.7978846
  %v14 = vmul.f32 %v8, 0.5
  %v15 = vtanh.pop %v13
  %v16 = vadd.f32 %v15, 1.0
  %v17 = vmul.f32 %v14, %v16
  %v18 = vlaneseq
  %vm19 = vcmp.ge.s32.totalorder %v18, 0
  %vm20 = vcmp.lt.s32.totalorder %v18, 512
  %vm21 = vmand %vm19, %vm20
  %22 = vst.msk [vmem:[%s1] sm:$0xf] %vm21, %v17
  // Predicated region
  $region6: #{activation_forward.1} parent=0 // pred_check
    _
  $region7: #{activation_forward.1} parent=0 // pred_check_branch
    %24 = sbr.rel (0) target = $region9
  $region8: #{activation_forward.1} parent=0 // pred_region
    _
  $region9: #{activation_forward.1} parent=0 // pred_fallthru
    _
  // Predicated region
  $region10: #{activation_forward.1} parent=0 // pred_check
    _
  $region11: #{activation_forward.1} parent=0 // pred_check_branch
    %26 = sbr.rel (0) target = $region13
  $region12: #{activation_forward.1} parent=0 // pred_region
    _
  $region13: #{activation_forward.1} parent=0 // pred_fallthru
    _

</llo_original>
